<compile_context>
chip_gen: v5e
topology: v5e:2x2
jax: 0.10.0
libtpu: 0.0.40
codegen_flags: <defaults>
</compile_context>

<pallas_src>
import functools

import jax
import jax.numpy as jnp
from jax import lax
from jax.experimental import pallas as pl
from jax.experimental.pallas import tpu as pltpu


# ---------------------------------------------------------------------------
# Fused kernel: one (batch, head) grid step = per-head QKV projection +
# softmax attention over the full sequence + accumulation of this head's
# contribution to the fused output projection.
# ---------------------------------------------------------------------------
def _fused_attention_kernel(x_ref, wq_ref, wk_ref, wv_ref, wo_ref, b_ref,
                            o_ref, acc_ref, *, heads):
    h = pl.program_id(1)

    @pl.when(h == 0)
    def _init():
        acc_ref[...] = jnp.zeros_like(acc_ref)

    cdt = wq_ref.dtype                      # MXU compute dtype (bf16 or f32)
    x = x_ref[...].astype(cdt)              # (n, dim), resident across heads

    # Per-head projections.  Weight blocks are (dim_head, dim) slices taken by
    # the BlockSpec along the sublane (out_features) axis -> no in-kernel
    # lane-offset slicing.  Contract over `dim` (PyTorch (out,in) layout).
    nt = (((1,), (1,)), ((), ()))           # lhs axis 1 . rhs axis 1
    q = lax.dot_general(x, wq_ref[...], nt, preferred_element_type=jnp.float32)
    k = lax.dot_general(x, wk_ref[...], nt, preferred_element_type=jnp.float32)
    v = lax.dot_general(x, wv_ref[...], nt, preferred_element_type=jnp.float32)

    # Scaled dot-product attention (scale pre-folded into wq).
    dots = lax.dot_general(q.astype(cdt), k.astype(cdt), nt,
                           preferred_element_type=jnp.float32)        # (n, n)
    m = jnp.max(dots, axis=-1, keepdims=True)
    p = jnp.exp(dots - m)
    # Normalise the attention weights with the EUP approximate reciprocal
    # BEFORE attn@v so the approximation error is not scaled by |out|.
    p = p * pl.reciprocal(jnp.sum(p, axis=-1, keepdims=True), approx=True)

    out_h = jnp.dot(p.astype(cdt), v.astype(cdt),
                    preferred_element_type=jnp.float32)               # (n, d)

    # Fused output projection: y += out_h @ W_out[:, h*d:(h+1)*d].T, written
    # as a plain matmul against the transposed per-head weight block (d, dim).
    acc_ref[...] += jnp.dot(out_h.astype(cdt), wo_ref[...],
                            preferred_element_type=jnp.float32)       # (n, dim)

    @pl.when(h == heads - 1)
    def _finalize():
        o_ref[...] = (acc_ref[...] + b_ref[...].astype(jnp.float32)
                      ).astype(o_ref.dtype)


# ---------------------------------------------------------------------------
# Wrapper
# ---------------------------------------------------------------------------
def attention_forward(x, w_qkv, w_out, b_out, *, heads, dim_head,
                      compute_dtype=jnp.bfloat16):
    """x: (b, n, dim); w_qkv: (3*inner, dim); w_out: (dim, inner); b_out: (dim,)."""
    b, n, dim = x.shape
    inner = heads * dim_head
    assert w_qkv.shape == (3 * inner, dim)
    assert w_out.shape == (dim, inner)
    assert b_out.shape == (dim,)
    scale = float(dim_head) ** -0.5

    # ---- Weight preparation (tiny one-off ops on the small weight tensors) ----
    # Fold the softmax scale into the q rows; transpose w_out so per-head
    # slices become sublane blocks; cast weights to the MXU compute dtype.
    w_qkv_p = w_qkv.at[:inner].multiply(scale).astype(compute_dtype)   # (3*inner, dim)
    w_out_t = w_out.T.astype(compute_dtype)                            # (inner, dim)
    b_out_2d = b_out.reshape(1, dim).astype(jnp.float32)

    # ---- VMEM budget / scheduler hints ----
    xbytes = x.dtype.itemsize
    cbytes = jnp.dtype(compute_dtype).itemsize
    vmem_est = (2 * n * dim * xbytes                 # x block (double-buffered)
                + 2 * n * dim * xbytes               # out block
                + 2 * 4 * dim_head * dim * cbytes    # 4 weight blocks
                + 2 * dim * 4                        # bias
                + n * dim * 4                        # f32 accumulator scratch
                + 3 * n * n * 4                      # dots / exp intermediates
                + 4 * n * dim_head * 4)              # q / k / v / out_h
    # Raise the scoped VMEM limit above the v5e default, stay below v7x's
    # 64 MiB physical VMEM.
    vmem_limit = int(min(max(2 * vmem_est, 32 * 1024 * 1024), 60 * 1024 * 1024))

    flops = (2 * b * n * dim * 3 * inner                # qkv projection
             + 2 * 2 * b * heads * n * n * dim_head     # dots + attn@v
             + 2 * b * n * inner * dim)                 # output projection
    bytes_accessed = (2 * b * n * dim * xbytes                       # x + y
                      + b * (3 * inner * dim + inner * dim) * cbytes # weights/step
                      + dim * 4)
    cost = pl.CostEstimate(flops=int(flops),
                           transcendentals=int(b * heads * n * n),
                           bytes_accessed=int(bytes_accessed))

    kernel = functools.partial(_fused_attention_kernel, heads=heads)
    y = pl.pallas_call(
        kernel,
        grid=(b, heads),
        in_specs=[
            # x block is constant along the head axis -> stays VMEM-resident.
            pl.BlockSpec((None, n, dim), lambda bi, h: (bi, 0, 0)),
            # Per-head weight blocks (sublane-axis slicing; minor dim is full).
            pl.BlockSpec((dim_head, dim), lambda bi, h: (h, 0)),              # w_q[h] (scaled)
            pl.BlockSpec((dim_head, dim), lambda bi, h: (heads + h, 0)),      # w_k[h]
            pl.BlockSpec((dim_head, dim), lambda bi, h: (2 * heads + h, 0)),  # w_v[h]
            pl.BlockSpec((dim_head, dim), lambda bi, h: (h, 0)),              # w_out.T[h]
            pl.BlockSpec((1, dim), lambda bi, h: (0, 0)),                     # bias
        ],
        out_specs=pl.BlockSpec((None, n, dim), lambda bi, h: (bi, 0, 0)),
        out_shape=jax.ShapeDtypeStruct((b, n, dim), x.dtype),
        scratch_shapes=[pltpu.VMEM((n, dim), jnp.float32)],
        compiler_params=pltpu.CompilerParams(
            dimension_semantics=("parallel", "arbitrary"),
            vmem_limit_bytes=vmem_limit,
        ),
        cost_estimate=cost,
    )(x, w_qkv_p, w_qkv_p, w_qkv_p, w_out_t, b_out_2d)
    return y


# ---------------------------------------------------------------------------
# Pure-JAX reference (for correctness check)
# ---------------------------------------------------------------------------
def attention_ref(x, w_qkv, w_out, b_out, *, heads, dim_head):
    b, n, dim = x.shape
    inner = heads * dim_head
    qkv = x @ w_qkv.T
    q, k, v = jnp.split(qkv, 3, axis=-1)

    def to_heads(t):
        return t.reshape(b, n, heads, dim_head).transpose(0, 2, 1, 3)

    q, k, v = to_heads(q), to_heads(k), to_heads(v)
    dots = jnp.einsum("bhid,bhjd->bhij", q, k) * (float(dim_head) ** -0.5)
    attn = jax.nn.softmax(dots, axis=-1)
    out = jnp.einsum("bhij,bhjd->bhid", attn, v)
    out = out.transpose(0, 2, 1, 3).reshape(b, n, inner)
    return out @ w_out.T + b_out


# ---------------------------------------------------------------------------
# Main
# ---------------------------------------------------------------------------
if __name__ == "__main__":
    # Small shapes consistent with the module: dim=32, heads=4, dim_head=16.
    batch, seq, dim = 2, 8, 32
    heads, dim_head = 4, 16
    inner = heads * dim_head

    key = jax.random.PRNGKey(0)
    kx, kq, kw, kb = jax.random.split(key, 4)

    x = jax.random.normal(kx, (batch, seq, dim), dtype=jnp.float32)
    # PyTorch nn.Linear shapes: (out_features, in_features).
    w_qkv = 0.05 * jax.random.normal(kq, (3 * inner, dim), dtype=jnp.float32)
    w_out = 0.05 * jax.random.normal(kw, (dim, inner), dtype=jnp.float32)
    b_out = 0.05 * jax.random.normal(kb, (dim,), dtype=jnp.float32)

    y_ref = attention_ref(x, w_qkv, w_out, b_out, heads=heads, dim_head=dim_head)

    # Full-precision path: only the approximate softmax reciprocal differs
    # from the reference -> tight tolerance.
    y_f32 = attention_forward(x, w_qkv, w_out, b_out, heads=heads,
                              dim_head=dim_head, compute_dtype=jnp.float32)
    y_f32 = jax.block_until_ready(y_f32)
    assert y_f32.shape == (batch, seq, dim)
    assert jnp.allclose(y_f32, y_ref, atol=2e-3, rtol=2e-3), "f32 mismatch vs reference"

    # Default mixed-precision path (bf16 MXU operands, f32 accumulation).
    y_bf16 = attention_forward(x, w_qkv, w_out, b_out, heads=heads,
                               dim_head=dim_head, compute_dtype=jnp.bfloat16)
    y_bf16 = jax.block_until_ready(y_bf16)
    assert y_bf16.shape == (batch, seq, dim)
    assert jnp.allclose(y_bf16, y_ref, atol=4e-2, rtol=4e-2), "bf16 mismatch vs reference"

    print("KERNEL_OK")
</pallas_src>

<mosaic_0001>
module attributes {stable_mosaic.version = 11 : i64} {
  func.func @_fused_attention_kernel(%arg0: i32, %arg1: i32, %arg2: memref<1x8x32xf32, #tpu.memory_space<vmem>>, %arg3: memref<16x32xf32, #tpu.memory_space<vmem>>, %arg4: memref<16x32xf32, #tpu.memory_space<vmem>>, %arg5: memref<16x32xf32, #tpu.memory_space<vmem>>, %arg6: memref<16x32xf32, #tpu.memory_space<vmem>>, %arg7: memref<1x32xf32, #tpu.memory_space<vmem>>, %arg8: memref<1x8x32xf32, #tpu.memory_space<vmem>>, %arg9: memref<8x32xf32, #tpu.memory_space<vmem>>) attributes {dimension_semantics = [#tpu.dimension_semantics<parallel>, #tpu.dimension_semantics<arbitrary>], iteration_bounds = array<i64: 2, 4>, scalar_prefetch = 0 : i64, scratch_operands = 1 : i64, tpu.core_type = #tpu.core_type<tc>, window_params = [{transform_indices = @transform_0, window_bounds = array<i64: 1, 8, 32>}, {transform_indices = @transform_1, window_bounds = array<i64: 16, 32>}, {transform_indices = @transform_2, window_bounds = array<i64: 16, 32>}, {transform_indices = @transform_3, window_bounds = array<i64: 16, 32>}, {transform_indices = @transform_4, window_bounds = array<i64: 16, 32>}, {pipeline_mode = #tpu.pipeline_mode<synchronous>, transform_indices = @transform_5, window_bounds = array<i64: 1, 32>}, {transform_indices = @transform_6, window_bounds = array<i64: 1, 8, 32>}]} {
    %c0_i32 = arith.constant 0 : i32
    %0 = arith.cmpi eq, %arg1, %c0_i32 : i32
    %1 = arith.extui %0 : i1 to i32
    %c0_i32_0 = arith.constant 0 : i32
    %2 = arith.cmpi ne, %1, %c0_i32_0 : i32
    scf.if %2 {
      %cst_23 = arith.constant 0.000000e+00 : f32
      %31 = vector.broadcast %cst_23 : f32 to vector<8x32xf32>
      %c0_24 = arith.constant 0 : index
      %c0_25 = arith.constant 0 : index
      %32 = vector.load %arg9[%c0_24, %c0_25] : memref<8x32xf32, #tpu.memory_space<vmem>>, vector<8x32xf32>
      tpu.vector_store %arg9[%c0_24, %c0_25], %31 {strides = array<i32>} : memref<8x32xf32, #tpu.memory_space<vmem>>, vector<8x32xf32>,
    } else {
    }
    %c0 = arith.constant 0 : index
    %c0_1 = arith.constant 0 : index
    %c0_2 = arith.constant 0 : index
    %3 = vector.load %arg2[%c0, %c0_1, %c0_2] : memref<1x8x32xf32, #tpu.memory_space<vmem>>, vector<1x8x32xf32>
    %4 = vector.shape_cast %3 : vector<1x8x32xf32> to vector<8x32xf32>
    %c0_3 = arith.constant 0 : index
    %c0_4 = arith.constant 0 : index
    %5 = vector.load %arg3[%c0_3, %c0_4] : memref<16x32xf32, #tpu.memory_space<vmem>>, vector<16x32xf32>
    %cst = arith.constant dense<0.000000e+00> : vector<8x16xf32>
    %6 = tpu.matmul %4, %5, %cst {dimension_numbers = #tpu.dot_dimension_numbers<[1], [1], [0], [0], [0, 0, 1, 0], [], []>} : vector<8x32xf32>, vector<16x32xf32>, vector<8x16xf32> -> vector<8x16xf32>
    %c0_5 = arith.constant 0 : index
    %c0_6 = arith.constant 0 : index
    %7 = vector.load %arg4[%c0_5, %c0_6] : memref<16x32xf32, #tpu.memory_space<vmem>>, vector<16x32xf32>
    %cst_7 = arith.constant dense<0.000000e+00> : vector<8x16xf32>
    %8 = tpu.matmul %4, %7, %cst_7 {dimension_numbers = #tpu.dot_dimension_numbers<[1], [1], [0], [0], [0, 0, 1, 0], [], []>} : vector<8x32xf32>, vector<16x32xf32>, vector<8x16xf32> -> vector<8x16xf32>
    %c0_8 = arith.constant 0 : index
    %c0_9 = arith.constant 0 : index
    %9 = vector.load %arg5[%c0_8, %c0_9] : memref<16x32xf32, #tpu.memory_space<vmem>>, vector<16x32xf32>
    %cst_10 = arith.constant dense<0.000000e+00> : vector<8x16xf32>
    %10 = tpu.matmul %4, %9, %cst_10 {dimension_numbers = #tpu.dot_dimension_numbers<[1], [1], [0], [0], [0, 0, 1, 0], [], []>} : vector<8x32xf32>, vector<16x32xf32>, vector<8x16xf32> -> vector<8x16xf32>
    %cst_11 = arith.constant dense<0.000000e+00> : vector<8x8xf32>
    %11 = tpu.matmul %6, %8, %cst_11 {dimension_numbers = #tpu.dot_dimension_numbers<[1], [1], [0], [0], [0, 0, 1, 0], [], []>} : vector<8x16xf32>, vector<8x16xf32>, vector<8x8xf32> -> vector<8x8xf32>
    %cst_12 = arith.constant dense<0xFF800000> : vector<8xf32>
    %12 = vector.multi_reduction <maximumf>, %11, %cst_12 [1] : vector<8x8xf32> to vector<8xf32>
    %13 = vector.shape_cast %12 : vector<8xf32> to vector<8x1xf32>
    %14 = vector.broadcast %13 : vector<8x1xf32> to vector<8x8xf32>
    %15 = arith.subf %11, %14 : vector<8x8xf32>
    %16 = math.exp %15 : vector<8x8xf32>
    %cst_13 = arith.constant dense<0.000000e+00> : vector<8xf32>
    %17 = vector.multi_reduction <add>, %16, %cst_13 [1] : vector<8x8xf32> to vector<8xf32>
    %18 = vector.shape_cast %17 : vector<8xf32> to vector<8x1xf32>
    %19 = tpu.reciprocal %18 {approx = true} : vector<8x1xf32> -> vector<8x1xf32>
    %20 = vector.broadcast %19 : vector<8x1xf32> to vector<8x8xf32>
    %21 = arith.mulf %16, %20 : vector<8x8xf32>
    %cst_14 = arith.constant dense<0.000000e+00> : vector<8x16xf32>
    %22 = tpu.matmul %21, %10, %cst_14 {dimension_numbers = #tpu.dot_dimension_numbers<[1], [0], [0], [1], [0, 0, 1, 1], [], []>} : vector<8x8xf32>, vector<8x16xf32>, vector<8x16xf32> -> vector<8x16xf32>
    %c0_15 = arith.constant 0 : index
    %c0_16 = arith.constant 0 : index
    %23 = vector.load %arg9[%c0_15, %c0_16] : memref<8x32xf32, #tpu.memory_space<vmem>>, vector<8x32xf32>
    %c0_17 = arith.constant 0 : index
    %c0_18 = arith.constant 0 : index
    %24 = vector.load %arg6[%c0_17, %c0_18] : memref<16x32xf32, #tpu.memory_space<vmem>>, vector<16x32xf32>
    %cst_19 = arith.constant dense<0.000000e+00> : vector<8x32xf32>
    %25 = tpu.matmul %22, %24, %cst_19 {dimension_numbers = #tpu.dot_dimension_numbers<[1], [0], [0], [1], [0, 0, 1, 1], [], []>} : vector<8x16xf32>, vector<16x32xf32>, vector<8x32xf32> -> vector<8x32xf32>
    %26 = arith.addf %23, %25 : vector<8x32xf32>
    %c0_20 = arith.constant 0 : index
    %c0_21 = arith.constant 0 : index
    %27 = vector.load %arg9[%c0_20, %c0_21] : memref<8x32xf32, #tpu.memory_space<vmem>>, vector<8x32xf32>
    tpu.vector_store %arg9[%c0_20, %c0_21], %26 {strides = array<i32>} : memref<8x32xf32, #tpu.memory_space<vmem>>, vector<8x32xf32>,
    %c3_i32 = arith.constant 3 : i32
    %28 = arith.cmpi eq, %arg1, %c3_i32 : i32
    %29 = arith.extui %28 : i1 to i32
    %c0_i32_22 = arith.constant 0 : i32
    %30 = arith.cmpi ne, %29, %c0_i32_22 : i32
    scf.if %30 {
      %c0_23 = arith.constant 0 : index
      %c0_24 = arith.constant 0 : index
      %31 = vector.load %arg9[%c0_23, %c0_24] : memref<8x32xf32, #tpu.memory_space<vmem>>, vector<8x32xf32>
      %c0_25 = arith.constant 0 : index
      %c0_26 = arith.constant 0 : index
      %32 = vector.load %arg7[%c0_25, %c0_26] : memref<1x32xf32, #tpu.memory_space<vmem>>, vector<1x32xf32>
      %33 = vector.broadcast %32 : vector<1x32xf32> to vector<8x32xf32>
      %34 = arith.addf %31, %33 : vector<8x32xf32>
      %c0_27 = arith.constant 0 : index
      %c0_28 = arith.constant 0 : index
      %c0_29 = arith.constant 0 : index
      %35 = vector.load %arg8[%c0_27, %c0_28, %c0_29] : memref<1x8x32xf32, #tpu.memory_space<vmem>>, vector<1x8x32xf32>
      %36 = vector.shape_cast %35 : vector<1x8x32xf32> to vector<8x32xf32>
      %37 = vector.shape_cast %34 : vector<8x32xf32> to vector<1x8x32xf32>
      tpu.vector_store %arg8[%c0_27, %c0_28, %c0_29], %37 {strides = array<i32>} : memref<1x8x32xf32, #tpu.memory_space<vmem>>, vector<1x8x32xf32>,
    } else {
    }
    return
  }
  func.func @transform_0(%arg0: i32, %arg1: i32) -> (i32, i32, i32) {
    %c0_i32 = arith.constant 0 : i32
    %c0_i32_0 = arith.constant 0 : i32
    %c0_i32_1 = arith.constant 0 : i32
    return %arg0, %c0_i32, %c0_i32_0 : i32, i32, i32
  }
  func.func @transform_1(%arg0: i32, %arg1: i32) -> (i32, i32) {
    %c0_i32 = arith.constant 0 : i32
    %c0_i32_0 = arith.constant 0 : i32
    return %arg1, %c0_i32 : i32, i32
  }
  func.func @transform_2(%arg0: i32, %arg1: i32) -> (i32, i32) {
    %c4_i32 = arith.constant 4 : i32
    %0 = arith.addi %c4_i32, %arg1 : i32
    %c0_i32 = arith.constant 0 : i32
    %c0_i32_0 = arith.constant 0 : i32
    return %0, %c0_i32 : i32, i32
  }
  func.func @transform_3(%arg0: i32, %arg1: i32) -> (i32, i32) {
    %c8_i32 = arith.constant 8 : i32
    %0 = arith.addi %c8_i32, %arg1 : i32
    %c0_i32 = arith.constant 0 : i32
    %c0_i32_0 = arith.constant 0 : i32
    return %0, %c0_i32 : i32, i32
  }
  func.func @transform_4(%arg0: i32, %arg1: i32) -> (i32, i32) {
    %c0_i32 = arith.constant 0 : i32
    %c0_i32_0 = arith.constant 0 : i32
    return %arg1, %c0_i32 : i32, i32
  }
  func.func @transform_5(%arg0: i32, %arg1: i32) -> (i32, i32) {
    %c0_i32 = arith.constant 0 : i32
    %c0_i32_0 = arith.constant 0 : i32
    %c0_i32_1 = arith.constant 0 : i32
    return %c0_i32, %c0_i32_0 : i32, i32
  }
  func.func @transform_6(%arg0: i32, %arg1: i32) -> (i32, i32, i32) {
    %c0_i32 = arith.constant 0 : i32
    %c0_i32_0 = arith.constant 0 : i32
    %c0_i32_1 = arith.constant 0 : i32
    return %arg0, %c0_i32, %c0_i32_0 : i32, i32, i32
  }
}

</mosaic_0001>

<llo_original>
// kernel: tpu_custom_call.1
$region0: #{tpu_custom_call.1}
  #allocation0 [shape = 'u32[]', space=smem, size = 0x4, offset = 0x4, fixed_abs, tag = 'smem constant byte address 0x4 - core index']
  #allocation1 [shape = 'u32[72,128]{1,0:T(1,128)}', space=vmem, size = 0x9000, scoped, tag = 'internal scratch']
  #allocation2 [shape = 'f32[8,32]{1,0:T(8,128)}', space=vmem, size = 0x1000, scoped, tag = 'scratch operand']
  %s0 = inlined_call_operand.vmem [shape: f32[2,8,32], index: 0, kind: input, shape index: {}]
  %s1 = inlined_call_operand.vmem [shape: f32[192,32], index: 1, kind: input, shape index: {}]
  %s2 = inlined_call_operand.vmem [shape: f32[192,32], index: 2, kind: input, shape index: {}]
  %s3 = inlined_call_operand.vmem [shape: f32[192,32], index: 3, kind: input, shape index: {}]
  %s4 = inlined_call_operand.vmem [shape: f32[64,32], index: 4, kind: input, shape index: {}]
  %s5 = inlined_call_operand.vmem [shape: f32[1,32], index: 5, kind: input, shape index: {}]
  %s6 = inlined_call_operand.hbm [shape: f32[2,8,32], index: 6, kind: output, shape index: {}]
  %s7 = sld [smem:[#allocation0]]
  $region65: #{tpu_custom_call.1} parent=0
    _
  %s9 = ssub.s32 1, %s7
  %s10 = scalar_select 0, %s9, %s7
  $region1: #{tpu_custom_call.1} parent=0
    #allocation3 [shape = 'u8[8192]{0}', space=vmem, size = 0x2000, scoped, tag = 'output window, operand 0']
    #allocation4 [shape = 's32[2]{0}', space=sflag, size = 0x8, scoped, tag = 'scoped memory for tpu_custom_call.1']
    %11 = vsyncpa [#allocation4], 0
    %s12 = scalar_lea.sflag [#allocation4], 1
    %13 = vsyncpa %s12, 0
    loop: start=0, step=1, limit=10
    $region2: #{tpu_custom_call.1} parent=1 // loop_pre_header
      _
    $region3: #{tpu_custom_call.1} parent=1 // loop_header
      %s15 = sphi 0, %s19
      %p16 = scmp.ge.s32.totalorder %s15, 10
      %s22 = sphi 0, %s34
      %s23 = sphi 0, %s30
      %s24 = sphi 0, %s22
      %s25 = sphi 0, %s23
      %s26 = sphi 0, %s24
      %s27 = sphi 0, %s25
      %s37 = sphi 0, %s39
      %s40 = sphi 0, %s37
      %s41 = sphi 0, %s40
      %s57 = sphi 0, %s41
      %s63 = sphi 0, %s65
      %s66 = sphi 0, %s63
      %s67 = sphi 0, %s66
      %s83 = sphi 0, %s67
      %s91 = sphi 0, %s93
      %s94 = sphi 0, %s91
      %s95 = sphi 0, %s94
      %s111 = sphi 0, %s95
      %s119 = sphi 0, %s121
      %s122 = sphi 0, %s119
      %s123 = sphi 0, %s122
      %s139 = sphi 0, %s123
      %s145 = sphi 0, %s147
      %s148 = sphi 0, %s145
      %s149 = sphi 0, %s148
      %s165 = sphi 0, %s149
      %s169 = sphi 0, %s169
      %s171 = sphi 0, %s169
      %s172 = sphi 0, %s171
      %s186 = sphi 0, %s172
      %s192 = sphi 0, %s194
      %s195 = sphi 0, %s192
      %s196 = sphi 0, %s195
      %s212 = sphi 0, %s196
    $region4: #{tpu_custom_call.1} parent=1 // loop_header_branch
      %18 = sbr.rel (%p16) target = $region8
    $region5: #{tpu_custom_call.1} parent=1 // loop_body
      %s20 = ssub.s32 %s15, 1
      %s21 = ssub.s32 %s15, 2
      %s28 = sadd.s32 1, %s23
      %p29 = scmp.ge.s32.totalorder %s28, 4
      %s30 = scalar_select %p29, 0, %s28
      %s31 = sadd.s32 1, %s22
      %s32 = scalar_select %p29, %s31, %s22
      %p33 = scmp.ge.s32.totalorder %s32, 2
      %s34 = scalar_select %p33, 0, %s32
      %s35 = ssub.s32 %s22, %s34
      %p36 = scmp.eq.s32.totalorder %s35, 0
      %s38 = sadd.s32 %s37, 1
      %s39 = scalar_select %p36, %s37, %s38
      %p42 = pneg %p36
      %p43 = scmp.eq.s32.totalorder %s15, 7
      %p44 = por %p42, %p43
      %p45 = scmp.ne.s32.totalorder %s37, %s40
      %p46 = scmp.eq.s32.totalorder %s15, 0
      %p47 = por %p45, %p46
      %p48 = scmp.ne.s32.totalorder %s37, %s40
      %p49 = scmp.eq.s32.totalorder %s20, 7
      %p50 = por %p48, %p49
      %p51 = scmp.ne.s32.totalorder %s40, %s41
      %p52 = scmp.eq.s32.totalorder %s20, 0
      %p53 = por %p51, %p52
      %p54 = scmp.ne.s32.totalorder %s40, %s41
      %p55 = scmp.eq.s32.totalorder %s21, 7
      %p56 = por %p54, %p55
      %p58 = scmp.ne.s32.totalorder %s41, %s57
      %p59 = scmp.eq.s32.totalorder %s21, 0
      %p60 = por %p58, %p59
      %s61 = ssub.s32 %s23, %s30
      %p62 = scmp.eq.s32.totalorder %s61, 0
      %s64 = sadd.s32 %s63, 1
      %s65 = scalar_select %p62, %s63, %s64
      %p68 = pneg %p62
      %p69 = scmp.eq.s32.totalorder %s15, 7
      %p70 = por %p68, %p69
      %p71 = scmp.ne.s32.totalorder %s63, %s66
      %p72 = scmp.eq.s32.totalorder %s15, 0
      %p73 = por %p71, %p72
      %p74 = scmp.ne.s32.totalorder %s63, %s66
      %p75 = scmp.eq.s32.totalorder %s20, 7
      %p76 = por %p74, %p75
      %p77 = scmp.ne.s32.totalorder %s66, %s67
      %p78 = scmp.eq.s32.totalorder %s20, 0
      %p79 = por %p77, %p78
      %p80 = scmp.ne.s32.totalorder %s66, %s67
      %p81 = scmp.eq.s32.totalorder %s21, 7
      %p82 = por %p80, %p81
      %p84 = scmp.ne.s32.totalorder %s67, %s83
      %p85 = scmp.eq.s32.totalorder %s21, 0
      %p86 = por %p84, %p85
      %s87 = sadd.s32 %s23, 4
      %s88 = sadd.s32 %s30, 4
      %s89 = ssub.s32 %s87, %s88
      %p90 = scmp.eq.s32.totalorder %s89, 0
      %s92 = sadd.s32 %s91, 1
      %s93 = scalar_select %p90, %s91, %s92
      %p96 = pneg %p90
      %p97 = scmp.eq.s32.totalorder %s15, 7
      %p98 = por %p96, %p97
      %p99 = scmp.ne.s32.totalorder %s91, %s94
      %p100 = scmp.eq.s32.totalorder %s15, 0
      %p101 = por %p99, %p100
      %p102 = scmp.ne.s32.totalorder %s91, %s94
      %p103 = scmp.eq.s32.totalorder %s20, 7
      %p104 = por %p102, %p103
      %p105 = scmp.ne.s32.totalorder %s94, %s95
      %p106 = scmp.eq.s32.totalorder %s20, 0
      %p107 = por %p105, %p106
      %p108 = scmp.ne.s32.totalorder %s94, %s95
      %p109 = scmp.eq.s32.totalorder %s21, 7
      %p110 = por %p108, %p109
      %p112 = scmp.ne.s32.totalorder %s95, %s111
      %p113 = scmp.eq.s32.totalorder %s21, 0
      %p114 = por %p112, %p113
      %s115 = sadd.s32 %s23, 8
      %s116 = sadd.s32 %s30, 8
      %s117 = ssub.s32 %s115, %s116
      %p118 = scmp.eq.s32.totalorder %s117, 0
      %s120 = sadd.s32 %s119, 1
      %s121 = scalar_select %p118, %s119, %s120
      %p124 = pneg %p118
      %p125 = scmp.eq.s32.totalorder %s15, 7
      %p126 = por %p124, %p125
      %p127 = scmp.ne.s32.totalorder %s119, %s122
      %p128 = scmp.eq.s32.totalorder %s15, 0
      %p129 = por %p127, %p128
      %p130 = scmp.ne.s32.totalorder %s119, %s122
      %p131 = scmp.eq.s32.totalorder %s20, 7
      %p132 = por %p130, %p131
      %p133 = scmp.ne.s32.totalorder %s122, %s123
      %p134 = scmp.eq.s32.totalorder %s20, 0
      %p135 = por %p133, %p134
      %p136 = scmp.ne.s32.totalorder %s122, %s123
      %p137 = scmp.eq.s32.totalorder %s21, 7
      %p138 = por %p136, %p137
      %p140 = scmp.ne.s32.totalorder %s123, %s139
      %p141 = scmp.eq.s32.totalorder %s21, 0
      %p142 = por %p140, %p141
      %s143 = ssub.s32 %s23, %s30
      %p144 = scmp.eq.s32.totalorder %s143, 0
      %s146 = sadd.s32 %s145, 1
      %s147 = scalar_select %p144, %s145, %s146
      %p150 = pneg %p144
      %p151 = scmp.eq.s32.totalorder %s15, 7
      %p152 = por %p150, %p151
      %p153 = scmp.ne.s32.totalorder %s145, %s148
      %p154 = scmp.eq.s32.totalorder %s15, 0
      %p155 = por %p153, %p154
      %p156 = scmp.ne.s32.totalorder %s145, %s148
      %p157 = scmp.eq.s32.totalorder %s20, 7
      %p158 = por %p156, %p157
      %p159 = scmp.ne.s32.totalorder %s148, %s149
      %p160 = scmp.eq.s32.totalorder %s20, 0
      %p161 = por %p159, %p160
      %p162 = scmp.ne.s32.totalorder %s148, %s149
      %p163 = scmp.eq.s32.totalorder %s21, 7
      %p164 = por %p162, %p163
      %p166 = scmp.ne.s32.totalorder %s149, %s165
      %p167 = scmp.eq.s32.totalorder %s21, 0
      %p168 = por %p166, %p167
      %s170 = sadd.s32 %s169, 1
      %p173 = scmp.eq.s32.totalorder %s15, 7
      %p174 = scmp.ne.s32.totalorder %s169, %s171
      %p175 = scmp.eq.s32.totalorder %s15, 0
      %p176 = por %p174, %p175
      %p177 = scmp.ne.s32.totalorder %s169, %s171
      %p178 = scmp.eq.s32.totalorder %s20, 7
      %p179 = por %p177, %p178
      %p180 = scmp.ne.s32.totalorder %s171, %s172
      %p181 = scmp.eq.s32.totalorder %s20, 0
      %p182 = por %p180, %p181
      %p183 = scmp.ne.s32.totalorder %s171, %s172
      %p184 = scmp.eq.s32.totalorder %s21, 7
      %p185 = por %p183, %p184
      %p187 = scmp.ne.s32.totalorder %s172, %s186
      %p188 = scmp.eq.s32.totalorder %s21, 0
      %p189 = por %p187, %p188
      %s190 = ssub.s32 %s22, %s34
      %p191 = scmp.eq.s32.totalorder %s190, 0
      %s193 = sadd.s32 %s192, 1
      %s194 = scalar_select %p191, %s192, %s193
      %p197 = pneg %p191
      %p198 = scmp.eq.s32.totalorder %s15, 7
      %p199 = por %p197, %p198
      %p200 = scmp.ne.s32.totalorder %s192, %s195
      %p201 = scmp.eq.s32.totalorder %s15, 0
      %p202 = por %p200, %p201
      %p203 = scmp.ne.s32.totalorder %s192, %s195
      %p204 = scmp.eq.s32.totalorder %s20, 7
      %p205 = por %p203, %p204
      %p206 = scmp.ne.s32.totalorder %s195, %s196
      %p207 = scmp.eq.s32.totalorder %s20, 0
      %p208 = por %p206, %p207
      %p209 = scmp.ne.s32.totalorder %s195, %s196
      %p210 = scmp.eq.s32.totalorder %s21, 7
      %p211 = por %p209, %p210
      %p213 = scmp.ne.s32.totalorder %s196, %s212
      %p214 = scmp.eq.s32.totalorder %s21, 0
      %p215 = por %p213, %p214
      %p216 = scmp.le.s32.totalorder 1, %s15
      %p217 = scmp.lt.s32.totalorder %s15, 9
      %p218 = pnand %p216, %p217
      %p219 = pneg %p218
      // Predicated region
      $region9: #{tpu_custom_call.1} parent=5 // pred_check
        _
      $region10: #{tpu_custom_call.1} parent=5 // pred_check_branch
        %221 = sbr.rel (%p218) target = $region12
      $region11: #{tpu_custom_call.1} parent=5 // pred_region
        %s222 = ssub.s32 %s15, 1
        // Predicated region
        $region13: #{tpu_custom_call.1} parent=11 // pred_check
          %p223 = pneg %p182
        $region14: #{tpu_custom_call.1} parent=11 // pred_check_branch
          %225 = sbr.rel (%p223) target = $region16
        $region15: #{tpu_custom_call.1} parent=11 // pred_region
          _
        $region16: #{tpu_custom_call.1} parent=11 // pred_fallthru
          _
      $region12: #{tpu_custom_call.1} parent=5 // pred_fallthru
        _
      %p226 = scmp.lt.s32.totalorder %s15, 8
      // Predicated region
      $region17: #{tpu_custom_call.1} parent=5 // pred_check
        %p227 = pneg %p226
      $region18: #{tpu_custom_call.1} parent=5 // pred_check_branch
        %229 = sbr.rel (%p227) target = $region20
      $region19: #{tpu_custom_call.1} parent=5 // pred_region
        // Predicated region
        $region21: #{tpu_custom_call.1} parent=19 // pred_check
          %p230 = pneg %p47
        $region22: #{tpu_custom_call.1} parent=19 // pred_check_branch
          %232 = sbr.rel (%p230) target = $region24
        $region23: #{tpu_custom_call.1} parent=19 // pred_region
          %p233 = scmp.lt.s32.totalorder %s22, 1
          %s234 = scalar_select %p233, %s22, 1
          %s235 = smul.addr %s234, 8
          %s236 = scalar_lea.vmem %s0, %s235
        $region24: #{tpu_custom_call.1} parent=19 // pred_fallthru
          _
        // Predicated region
        $region25: #{tpu_custom_call.1} parent=19 // pred_check
          %p237 = pneg %p73
        $region26: #{tpu_custom_call.1} parent=19 // pred_check_branch
          %239 = sbr.rel (%p237) target = $region28
        $region27: #{tpu_custom_call.1} parent=19 // pred_region
          %s240 = smul.u32 2, %s23
          %p241 = scmp.lt.s32.totalorder %s240, 23
          %s242 = scalar_select %p241, %s240, 23
          %s243 = smul.addr %s242, 8
          %s244 = scalar_lea.vmem %s1, %s243
          %s245 = smul.u32 2, %s23
        $region28: #{tpu_custom_call.1} parent=19 // pred_fallthru
          _
        // Predicated region
        $region29: #{tpu_custom_call.1} parent=19 // pred_check
          %p246 = pneg %p101
        $region30: #{tpu_custom_call.1} parent=19 // pred_check_branch
          %248 = sbr.rel (%p246) target = $region32
        $region31: #{tpu_custom_call.1} parent=19 // pred_region
          %s249 = sadd.s32 %s23, 4
          %s250 = smul.u32 2, %s249
          %p251 = scmp.lt.s32.totalorder %s250, 23
          %s252 = scalar_select %p251, %s250, 23
          %s253 = smul.addr %s252, 8
          %s254 = scalar_lea.vmem %s2, %s253
          %s255 = sadd.s32 %s23, 4
          %s256 = smul.u32 2, %s255
        $region32: #{tpu_custom_call.1} parent=19 // pred_fallthru
          _
        // Predicated region
        $region33: #{tpu_custom_call.1} parent=19 // pred_check
          %p257 = pneg %p129
        $region34: #{tpu_custom_call.1} parent=19 // pred_check_branch
          %259 = sbr.rel (%p257) target = $region36
        $region35: #{tpu_custom_call.1} parent=19 // pred_region
          %s260 = sadd.s32 %s23, 8
          %s261 = smul.u32 2, %s260
          %p262 = scmp.lt.s32.totalorder %s261, 23
          %s263 = scalar_select %p262, %s261, 23
          %s264 = smul.addr %s263, 8
          %s265 = scalar_lea.vmem %s3, %s264
          %s266 = sadd.s32 %s23, 8
          %s267 = smul.u32 2, %s266
        $region36: #{tpu_custom_call.1} parent=19 // pred_fallthru
          _
        // Predicated region
        $region37: #{tpu_custom_call.1} parent=19 // pred_check
          %p268 = pneg %p155
        $region38: #{tpu_custom_call.1} parent=19 // pred_check_branch
          %270 = sbr.rel (%p268) target = $region40
        $region39: #{tpu_custom_call.1} parent=19 // pred_region
          %s271 = smul.u32 2, %s23
          %p272 = scmp.lt.s32.totalorder %s271, 7
          %s273 = scalar_select %p272, %s271, 7
          %s274 = smul.addr %s273, 8
          %s275 = scalar_lea.vmem %s4, %s274
          %s276 = smul.u32 2, %s23
        $region40: #{tpu_custom_call.1} parent=19 // pred_fallthru
          _
      $region20: #{tpu_custom_call.1} parent=5 // pred_fallthru
        _
      %p277 = scmp.le.s32.totalorder 1, %s15
      %p278 = scmp.lt.s32.totalorder %s15, 9
      %p279 = pnand %p277, %p278
      %p280 = pneg %p279
      // Predicated region
      $region41: #{tpu_custom_call.1} parent=5 // pred_check
        _
      $region42: #{tpu_custom_call.1} parent=5 // pred_check_branch
        %282 = sbr.rel (%p279) target = $region44
      $region43: #{tpu_custom_call.1} parent=5 // pred_region
        %s283 = ssub.s32 %s15, 1
        %p284 = scmp.lt.s32.totalorder %s24, 1
        %s285 = scalar_select %p284, %s24, 1
        %s286 = smul.addr %s285, 8
        %s287 = scalar_lea.vmem %s0, %s286
        %p288 = pneg %p53
        %p289 = pneg %p50
        %s290 = smul.u32 2, %s25
        %p291 = scmp.lt.s32.totalorder %s290, 23
        %s292 = scalar_select %p291, %s290, 23
        %s293 = smul.addr %s292, 8
        %s294 = scalar_lea.vmem %s1, %s293
        %p295 = pneg %p79
        %p296 = pneg %p76
        %s297 = sadd.s32 %s25, 4
        %s298 = smul.u32 2, %s297
        %p299 = scmp.lt.s32.totalorder %s298, 23
        %s300 = scalar_select %p299, %s298, 23
        %s301 = smul.addr %s300, 8
        %s302 = scalar_lea.vmem %s2, %s301
        %p303 = pneg %p107
        %p304 = pneg %p104
        %s305 = sadd.s32 %s25, 8
        %s306 = smul.u32 2, %s305
        %p307 = scmp.lt.s32.totalorder %s306, 23
        %s308 = scalar_select %p307, %s306, 23
        %s309 = smul.addr %s308, 8
        %s310 = scalar_lea.vmem %s3, %s309
        %p311 = pneg %p135
        %p312 = pneg %p132
        %s313 = smul.u32 2, %s25
        %p314 = scmp.lt.s32.totalorder %s313, 7
        %s315 = scalar_select %p314, %s313, 7
        %s316 = smul.addr %s315, 8
        %s317 = scalar_lea.vmem %s4, %s316
        %p318 = pneg %p161
        %p319 = pneg %p158
        %p320 = pneg %p182
        %p321 = pneg %p179
        %p322 = pneg %p208
        %p323 = pneg %p205
        %s324 = sand.u32 %s195, 1
        %s325 = scalar_lea.sflag [#allocation4], %s324
        %s326 = sand.u32 %s195, 1
        %s327 = smul.addr %s326, 8
        %s328 = scalar_lea.vmem [#allocation3], %s327
        %p329 = scmp.lt.s32.totalorder %s24, 1
        %s330 = scalar_select %p329, %s24, 1
        %s331 = smul.addr %s330, 8
        %s332 = scalar_lea.vmem %s0, %s331
        %s333 = smul.u32 2, %s25
        %p334 = scmp.lt.s32.totalorder %s333, 23
        %s335 = scalar_select %p334, %s333, 23
        %s336 = smul.addr %s335, 8
        %s337 = scalar_lea.vmem %s1, %s336
        %s338 = smul.u32 2, %s25
        %s339 = sadd.s32 %s25, 4
        %s340 = smul.u32 2, %s339
        %p341 = scmp.lt.s32.totalorder %s340, 23
        %s342 = scalar_select %p341, %s340, 23
        %s343 = smul.addr %s342, 8
        %s344 = scalar_lea.vmem %s2, %s343
        %s345 = sadd.s32 %s25, 4
        %s346 = smul.u32 2, %s345
        %s347 = sadd.s32 %s25, 8
        %s348 = smul.u32 2, %s347
        %p349 = scmp.lt.s32.totalorder %s348, 23
        %s350 = scalar_select %p349, %s348, 23
        %s351 = smul.addr %s350, 8
        %s352 = scalar_lea.vmem %s3, %s351
        %s353 = sadd.s32 %s25, 8
        %s354 = smul.u32 2, %s353
        %s355 = smul.u32 2, %s25
        %p356 = scmp.lt.s32.totalorder %s355, 7
        %s357 = scalar_select %p356, %s355, 7
        %s358 = smul.addr %s357, 8
        %s359 = scalar_lea.vmem %s4, %s358
        %s360 = smul.u32 2, %s25
        %p361 = scmp.eq.s32.totalorder %s25, 0
        // Predicated region
        $region45: #{tpu_custom_call.1} parent=43 // pred_check
          %p362 = pneg %p361
        $region46: #{tpu_custom_call.1} parent=43 // pred_check_branch
          %364 = sbr.rel (%p362) target = $region48
        $region47: #{tpu_custom_call.1} parent=43 // pred_region
          %vm365 = vcmask 261120
          %366 = vst.msk [vmem:[#allocation2] sm:$0xff] %vm365, 0.0
        $region48: #{tpu_custom_call.1} parent=43 // pred_fallthru
          _
        %v367 = vld [vmem:[%s332] sm:$0xff]
        %v368 = vld [vmem:[%s337] sm:$0xff]
        %v369 = vld [vmem:[%s337 + $0x8] sm:$0xff]
        %vm370 = vcmask 261120
        %v372 = vsel %vm370, %v367, 0
        %v375 = vsel %vm370, %v368, 0
        %v378 = vsel %vm370, %v369, 0
        %380 = vmatpush.xpose.msra.mxu0 0.0
        %381 = vmatpush.xpose.msra.mxu0 0.0
        %382 = vmatpush.xpose.msra.mxu0 0.0
        %383 = vmatpush.xpose.msra.mxu0 0.0
        %384 = vmatpush.xpose.msra.mxu0 0.0
        %385 = vmatpush.xpose.msra.mxu0 0.0
        %386 = vmatpush.xpose.msra.mxu0 0.0
        %387 = vmatpush.xpose.msra.mxu0 0.0
        %388 = vmatpush.xpose.msra.mxu0 0.0
        %389 = vmatpush.xpose.msra.mxu0 0.0
        %390 = vmatpush.xpose.msra.mxu0 0.0
        %391 = vmatpush.xpose.msra.mxu0 0.0
        %392 = vmatpush.xpose.msra.mxu0 0.0
        %393 = vmatpush.xpose.msra.mxu0 0.0
        %394 = vmatpush.xpose.msra.mxu0 %v378
        %395 = vmatpush.xpose.msra.mxu0 %v375
        %396 = vmatmul.f32.gmra.mxu0 %v372
        %v397 = vpop.f32.mrf.mxu0
        %v398 = vadd.f32 0.0, %v397
        %399 = vdwg.mxu0
        %v400 = vld [vmem:[%s344] sm:$0xff]
        %v401 = vld [vmem:[%s344 + $0x8] sm:$0xff]
        %v403 = vsel %vm370, %v400, 0
        %v406 = vsel %vm370, %v401, 0
        %408 = vmatpush.xpose.msra.mxu0 0.0
        %409 = vmatpush.xpose.msra.mxu0 0.0
        %410 = vmatpush.xpose.msra.mxu0 0.0
        %411 = vmatpush.xpose.msra.mxu0 0.0
        %412 = vmatpush.xpose.msra.mxu0 0.0
        %413 = vmatpush.xpose.msra.mxu0 0.0
        %414 = vmatpush.xpose.msra.mxu0 0.0
        %415 = vmatpush.xpose.msra.mxu0 0.0
        %416 = vmatpush.xpose.msra.mxu0 0.0
        %417 = vmatpush.xpose.msra.mxu0 0.0
        %418 = vmatpush.xpose.msra.mxu0 0.0
        %419 = vmatpush.xpose.msra.mxu0 0.0
        %420 = vmatpush.xpose.msra.mxu0 0.0
        %421 = vmatpush.xpose.msra.mxu0 0.0
        %422 = vmatpush.xpose.msra.mxu0 %v406
        %423 = vmatpush.xpose.msra.mxu0 %v403
        %424 = vmatmul.f32.gmra.mxu0 %v372
        %v425 = vpop.f32.mrf.mxu0
        %v426 = vadd.f32 0.0, %v425
        %427 = vdwg.mxu0
        %v428 = vld [vmem:[%s352] sm:$0xff]
        %v429 = vld [vmem:[%s352 + $0x8] sm:$0xff]
        %v431 = vsel %vm370, %v428, 0
        %v434 = vsel %vm370, %v429, 0
        %436 = vmatpush.xpose.msra.mxu0 0.0
        %437 = vmatpush.xpose.msra.mxu0 0.0
        %438 = vmatpush.xpose.msra.mxu0 0.0
        %439 = vmatpush.xpose.msra.mxu0 0.0
        %440 = vmatpush.xpose.msra.mxu0 0.0
        %441 = vmatpush.xpose.msra.mxu0 0.0
        %442 = vmatpush.xpose.msra.mxu0 0.0
        %443 = vmatpush.xpose.msra.mxu0 0.0
        %444 = vmatpush.xpose.msra.mxu0 0.0
        %445 = vmatpush.xpose.msra.mxu0 0.0
        %446 = vmatpush.xpose.msra.mxu0 0.0
        %447 = vmatpush.xpose.msra.mxu0 0.0
        %448 = vmatpush.xpose.msra.mxu0 0.0
        %449 = vmatpush.xpose.msra.mxu0 0.0
        %450 = vmatpush.xpose.msra.mxu0 %v434
        %451 = vmatpush.xpose.msra.mxu0 %v431
        %452 = vmatmul.f32.gmra.mxu0 %v372
        %v453 = vpop.f32.mrf.mxu0
        %v454 = vadd.f32 0.0, %v453
        %455 = vdwg.mxu0
        %vm456 = vcmask 130048
        %v458 = vsel %vm456, %v398, 0
        %v461 = vsel %vm456, %v426, 0
        %463 = vmatpush.xpose.msra.mxu0 0.0
        %464 = vmatpush.xpose.msra.mxu0 0.0
        %465 = vmatpush.xpose.msra.mxu0 0.0
        %466 = vmatpush.xpose.msra.mxu0 0.0
        %467 = vmatpush.xpose.msra.mxu0 0.0
        %468 = vmatpush.xpose.msra.mxu0 0.0
        %469 = vmatpush.xpose.msra.mxu0 0.0
        %470 = vmatpush.xpose.msra.mxu0 0.0
        %471 = vmatpush.xpose.msra.mxu0 0.0
        %472 = vmatpush.xpose.msra.mxu0 0.0
        %473 = vmatpush.xpose.msra.mxu0 0.0
        %474 = vmatpush.xpose.msra.mxu0 0.0
        %475 = vmatpush.xpose.msra.mxu0 0.0
        %476 = vmatpush.xpose.msra.mxu0 0.0
        %477 = vmatpush.xpose.msra.mxu0 0.0
        %478 = vmatpush.xpose.msra.mxu0 %v461
        %479 = vmatmul.f32.gmra.mxu0 %v458
        %v480 = vpop.f32.mrf.mxu0
        %v481 = vadd.f32 0.0, %v480
        %482 = vdwg.mxu0
        %vm483 = vcmask 64512
        %v484 = vsel %vm483, %v481, -inf
        %485 = vmax.xlane.f32.xlu0 %v484
        %v486 = vpop.xlane.xlu0 %485
        %v487 = vsub.f32 %v481, %v486
        %v488 = vmul.f32 %v487, 1.442695
        %v489 = vpow.pop %v488
        %v490 = vsel %vm483, %v489, 0.0
        %491 = vadd.xlane.f32.xlu0 %v490
        %v492 = vpop.xlane.xlu0 %491
        %v493 = vrcp.pop %v492
        %v494 = vmul.f32 %v489, %v493
        %v496 = vsel %vm483, %v494, 0
        %498 = vmatpush.msra.mxu0 0.0
        %499 = vmatpush.msra.mxu0 0.0
        %500 = vmatpush.msra.mxu0 0.0
        %501 = vmatpush.msra.mxu0 0.0
        %502 = vmatpush.msra.mxu0 0.0
        %503 = vmatpush.msra.mxu0 0.0
        %504 = vmatpush.msra.mxu0 0.0
        %505 = vmatpush.msra.mxu0 0.0
        %506 = vmatpush.msra.mxu0 0.0
        %507 = vmatpush.msra.mxu0 0.0
        %508 = vmatpush.msra.mxu0 0.0
        %509 = vmatpush.msra.mxu0 0.0
        %510 = vmatpush.msra.mxu0 0.0
        %511 = vmatpush.msra.mxu0 0.0
        %512 = vmatpush.msra.mxu0 0.0
        %513 = vmatpush.msra.mxu0 %v454
        %514 = vmatmul.f32.gmra.mxu0 %v496
        %v515 = vpop.f32.mrf.mxu0
        %v516 = vadd.f32 0.0, %v515
        %517 = vdwg.mxu0
        %v518 = vld [vmem:[#allocation2] sm:$0xff]
        %v519 = vld [vmem:[%s359] sm:$0xff]
        %v520 = vld [vmem:[%s359 + $0x8] sm:$0xff]
        %v522 = vsel %vm456, %v516, 0
        %524 = vmatpush.msra.mxu0 0.0
        %525 = vmatpush.msra.mxu0 0.0
        %526 = vmatpush.msra.mxu0 0.0
        %527 = vmatpush.msra.mxu0 0.0
        %528 = vmatpush.msra.mxu0 0.0
        %529 = vmatpush.msra.mxu0 0.0
        %530 = vmatpush.msra.mxu0 0.0
        %531 = vmatpush.msra.mxu0 0.0
        %532 = vmatpush.msra.mxu0 0.0
        %533 = vmatpush.msra.mxu0 0.0
        %534 = vmatpush.msra.mxu0 0.0
        %535 = vmatpush.msra.mxu0 0.0
        %536 = vmatpush.msra.mxu0 0.0
        %537 = vmatpush.msra.mxu0 0.0
        %538 = vmatpush.msra.mxu0 %v520
        %539 = vmatpush.msra.mxu0 %v519
        %540 = vmatmul.f32.gmra.mxu0 %v522
        %v541 = vpop.f32.mrf.mxu0
        %v542 = vadd.f32 0.0, %v541
        %543 = vdwg.mxu0
        %v544 = vadd.f32 %v518, %v542
        %545 = vst.msk [vmem:[#allocation2] sm:$0xff] %vm370, %v544
        %p546 = scmp.eq.s32.totalorder %s25, 3
        // Predicated region
        $region49: #{tpu_custom_call.1} parent=43 // pred_check
          %p547 = pneg %p546
        $region50: #{tpu_custom_call.1} parent=43 // pred_check_branch
          %549 = sbr.rel (%p547) target = $region52
        $region51: #{tpu_custom_call.1} parent=43 // pred_region
          %v550 = vld [vmem:[#allocation2] sm:$0xff]
          %v551 = vld [vmem:[%s5] sm:$0x1]
          %v553 = vperm.slane %v551, 0
          %v555 = vadd.f32 %v550, %v553
          %556 = vst.msk [vmem:[%s328] sm:$0xff] %vm370, %v555
        $region52: #{tpu_custom_call.1} parent=43 // pred_fallthru
          _
        %s557 = sand.u32 %s195, 1
        %s558 = scalar_lea.sflag [#allocation4], %s557
        %s559 = sand.u32 %s195, 1
        %s560 = smul.addr %s559, 8
        %s561 = scalar_lea.vmem [#allocation3], %s560
        // Predicated region
        $region53: #{tpu_custom_call.1} parent=43 // pred_check
          %p562 = pneg %p205
        $region54: #{tpu_custom_call.1} parent=43 // pred_check_branch
          %564 = sbr.rel (%p562) target = $region56
        $region55: #{tpu_custom_call.1} parent=43 // pred_region
          %566 = vsyncadd %s558, 0
          %s567 = smul.addr %s24, 8
          %s568 = scalar_lea.hbm %s6, %s567
          %s570 = sshll.u32 %s561, 4
          %s571 = int_to_ptr.vmem [resolvable:$true] %s570
          %s572 = sshll.u32 %s568, 4
          %s573 = int_to_ptr.hbm [resolvable:$true] %s572
          %575 = dma.vmem_to_hbm [thread:$0]  %s571, 128, %s573, %s558
        $region56: #{tpu_custom_call.1} parent=43 // pred_fallthru
          _
      $region44: #{tpu_custom_call.1} parent=5 // pred_fallthru
        _
      %p576 = scmp.le.s32.totalorder 2, %s15
      // Predicated region
      $region57: #{tpu_custom_call.1} parent=5 // pred_check
        %p577 = pneg %p576
      $region58: #{tpu_custom_call.1} parent=5 // pred_check_branch
        %579 = sbr.rel (%p577) target = $region60
      $region59: #{tpu_custom_call.1} parent=5 // pred_region
        %s580 = ssub.s32 %s15, 2
        // Predicated region
        $region61: #{tpu_custom_call.1} parent=59 // pred_check
          %p581 = pneg %p211
        $region62: #{tpu_custom_call.1} parent=59 // pred_check_branch
          %583 = sbr.rel (%p581) target = $region64
        $region63: #{tpu_custom_call.1} parent=59 // pred_region
          %s584 = sand.u32 %s196, 1
          %s585 = scalar_lea.sflag [#allocation4], %s584
          %s586 = sand.u32 %s196, 1
          %s587 = smul.addr %s586, 8
          %s588 = scalar_lea.vmem [#allocation3], %s587
          %590 = dma.done %s585, 128
        $region64: #{tpu_custom_call.1} parent=59 // pred_fallthru
          _
      $region60: #{tpu_custom_call.1} parent=5 // pred_fallthru
        _
    $region6: #{tpu_custom_call.1} parent=1 // loop_footer
      %s19 = sadd.s32 1, %s15
    $region7: #{tpu_custom_call.1} parent=1 // loop_footer_branch
      %14 = sbr.rel target = $region3
    $region8: #{tpu_custom_call.1} parent=1 // loop_exit
      _
    %591 = vsyncpa [#allocation4], 1
    %s592 = scalar_lea.sflag [#allocation4], 1
    %593 = vsyncpa %s592, 1

</llo_original>
